<compile_context>
chip_gen: v7x
topology: tpu7x:2x2x1
jax: 0.10.0
libtpu: 0.0.40
codegen_flags: <defaults>
</compile_context>

<pallas_src>
import numpy as np
import jax
import jax.numpy as jnp
from jax.experimental import pallas as pl
from jax.experimental.pallas import tpu as pltpu

_K = 8  # JPEG block size


# ------------------------------ Pallas kernel -------------------------------

def _block_merge_kernel(p_ref, o_ref):
    # p_ref: (1, tr, wc, 8, 8)  -- tr block-rows of 8x8 patches
    # o_ref: (1, tr, 8, W)      -- lane-dense image slab, W = wc*8
    wc = p_ref.shape[2]
    for bj in range(wc):  # static unroll over block columns
        # Whole 8x8 block column bj for every block-row in the tile:
        #   o[t, r, 8*bj + c] = p[t, bj, r, c]
        o_ref[0, :, :, pl.ds(bj * _K, _K)] = p_ref[0, :, bj, :, :]


# --------------------------------- helpers -----------------------------------

def _round_up(x, m):
    return (x + m - 1) // m * m


def _default_vmem_budget():
    """Generation-aware budget for the double-buffered tiles."""
    cap = 64 * 1024 * 1024  # conservative fallback (v7x per-TC VMEM)
    try:
        cap = int(getattr(pltpu.get_tpu_info(), "vmem_capacity_bytes", cap))
    except Exception:
        pass
    # ~24 MiB of tiles on 128 MiB parts (v5e/v6e), capacity/4 (~16 MiB) on v7x.
    return max(4 * 1024 * 1024, min(cap // 4, 24 * 1024 * 1024))


def _pick_tile_rows(hc, wc, width, itemsize, budget_bytes):
    """Block-rows per grid step whose padding-aware, double-buffered VMEM
    footprint fits in budget_bytes (prefers a divisor of hc near the cap)."""
    sub_bytes = max(_K * itemsize, 32)                # sublane padding (f32/bf16/int8)
    in_row = wc * 128 * sub_bytes                     # (wc, 8, 8) -> (wc, sub, 128)
    out_row = _round_up(width, 128) * sub_bytes       # (8, W)     -> (sub, ceil128(W))
    per_row = 2 * (in_row + out_row)                  # x2 double buffering
    cap = int(max(1, min(hc, budget_bytes // per_row)))
    # Prefer an exact divisor close to the cap (avoids a ragged last tile),
    # but never shrink below ~3/4 of the cap just to divide evenly.
    for tr in range(cap, max(1, (3 * cap) // 4) - 1, -1):
        if hc % tr == 0:
            return tr
    return cap


# --------------------------------- wrapper ----------------------------------

def block_merging(patches, height, width, *, vmem_budget_bytes=None):
    """Merge (B, (H/8)*(W/8), 8, 8) blocks into a (B, H, W) image."""
    assert height % _K == 0 and width % _K == 0
    B, N = patches.shape[0], patches.shape[1]
    hc, wc = height // _K, width // _K
    assert N == hc * wc, (N, hc, wc)
    assert patches.shape[2:] == (_K, _K), patches.shape

    if vmem_budget_bytes is None:
        vmem_budget_bytes = _default_vmem_budget()

    # Free, contiguous reshape: (B, N, 8, 8) -> (B, hc, wc, 8, 8)
    x = patches.reshape(B, hc, wc, _K, _K)

    itemsize = jnp.dtype(patches.dtype).itemsize
    tr = _pick_tile_rows(hc, wc, width, itemsize, vmem_budget_bytes)

    out4 = pl.pallas_call(
        _block_merge_kernel,
        out_shape=jax.ShapeDtypeStruct((B, hc, _K, width), patches.dtype),
        grid=(B, pl.cdiv(hc, tr)),
        in_specs=[pl.BlockSpec((1, tr, wc, _K, _K),
                               lambda b, i: (b, i, 0, 0, 0))],
        out_specs=pl.BlockSpec((1, tr, _K, width),
                               lambda b, i: (b, i, 0, 0)),
        compiler_params=pltpu.CompilerParams(
            dimension_semantics=("parallel", "parallel"),
            vmem_limit_bytes=32 * 1024 * 1024),
    )(x)

    # Free, contiguous reshape: (B, hc, 8, W) -> (B, H, W)
    return out4.reshape(B, height, width)


# ---------------------------- pure-JAX reference -----------------------------

def _reference(patches, height, width):
    k = _K
    B = patches.shape[0]
    x = patches.reshape(B, height // k, width // k, k, k)
    x = jnp.transpose(x, (0, 1, 3, 2, 4))
    return x.reshape(B, height, width)


# ----------------------------------- main ------------------------------------

if __name__ == "__main__":
    key = jax.random.PRNGKey(0)

    # Primary small test: batch=2, 16x16 image -> 4 blocks of 8x8 per image.
    B, H, W = 2, 16, 16
    n_blocks = (H // _K) * (W // _K)
    patches = jax.random.normal(key, (B, n_blocks, _K, _K), dtype=jnp.float32)

    out = jax.block_until_ready(block_merging(patches, H, W))
    ref = jax.block_until_ready(_reference(patches, H, W))
    assert out.shape == (B, H, W), out.shape
    np.testing.assert_array_equal(np.asarray(out), np.asarray(ref))

    # Second case exercises a multi-step pipelined grid (tr=3 over hc=12,
    # lane-dense W=128 output rows).
    B2, H2, W2 = 2, 96, 128
    n2 = (H2 // _K) * (W2 // _K)
    patches2 = jax.random.normal(jax.random.PRNGKey(1), (B2, n2, _K, _K),
                                 dtype=jnp.float32)
    out2 = jax.block_until_ready(
        block_merging(patches2, H2, W2, vmem_budget_bytes=450_000))
    ref2 = jax.block_until_ready(_reference(patches2, H2, W2))
    np.testing.assert_array_equal(np.asarray(out2), np.asarray(ref2))

    print("KERNEL_OK")
</pallas_src>

<mosaic_0001>
module attributes {stable_mosaic.version = 11 : i64} {
  func.func @_block_merge_kernel(%arg0: i32, %arg1: i32, %arg2: memref<1x2x2x8x8xf32, #tpu.memory_space<vmem>>, %arg3: memref<1x2x8x16xf32, #tpu.memory_space<vmem>>) attributes {dimension_semantics = [#tpu.dimension_semantics<parallel>, #tpu.dimension_semantics<parallel>], iteration_bounds = array<i64: 2, 1>, scalar_prefetch = 0 : i64, scratch_operands = 0 : i64, tpu.core_type = #tpu.core_type<tc>, window_params = [{transform_indices = @transform_0, window_bounds = array<i64: 1, 2, 2, 8, 8>}, {transform_indices = @transform_1, window_bounds = array<i64: 1, 2, 8, 16>}]} {
    %c0 = arith.constant 0 : index
    %c0_0 = arith.constant 0 : index
    %c0_1 = arith.constant 0 : index
    %c0_2 = arith.constant 0 : index
    %c0_3 = arith.constant 0 : index
    %0 = vector.load %arg2[%c0, %c0_0, %c0_1, %c0_2, %c0_3] : memref<1x2x2x8x8xf32, #tpu.memory_space<vmem>>, vector<1x2x1x8x8xf32>
    %1 = vector.shape_cast %0 : vector<1x2x1x8x8xf32> to vector<2x8x8xf32>
    %c0_4 = arith.constant 0 : index
    %c0_5 = arith.constant 0 : index
    %c0_6 = arith.constant 0 : index
    %c0_7 = arith.constant 0 : index
    %2 = vector.load %arg3[%c0_4, %c0_5, %c0_6, %c0_7] : memref<1x2x8x16xf32, #tpu.memory_space<vmem>>, vector<1x2x8x8xf32>
    %3 = vector.shape_cast %2 : vector<1x2x8x8xf32> to vector<2x8x8xf32>
    %4 = vector.shape_cast %1 : vector<2x8x8xf32> to vector<1x2x8x8xf32>
    tpu.vector_store %arg3[%c0_4, %c0_5, %c0_6, %c0_7], %4 {strides = array<i32>} : memref<1x2x8x16xf32, #tpu.memory_space<vmem>>, vector<1x2x8x8xf32>,
    %c0_8 = arith.constant 0 : index
    %c0_9 = arith.constant 0 : index
    %c1 = arith.constant 1 : index
    %c0_10 = arith.constant 0 : index
    %c0_11 = arith.constant 0 : index
    %5 = vector.load %arg2[%c0_8, %c0_9, %c1, %c0_10, %c0_11] : memref<1x2x2x8x8xf32, #tpu.memory_space<vmem>>, vector<1x2x1x8x8xf32>
    %6 = vector.shape_cast %5 : vector<1x2x1x8x8xf32> to vector<2x8x8xf32>
    %c0_12 = arith.constant 0 : index
    %c0_13 = arith.constant 0 : index
    %c0_14 = arith.constant 0 : index
    %c8 = arith.constant 8 : index
    %7 = vector.load %arg3[%c0_12, %c0_13, %c0_14, %c8] : memref<1x2x8x16xf32, #tpu.memory_space<vmem>>, vector<1x2x8x8xf32>
    %8 = vector.shape_cast %7 : vector<1x2x8x8xf32> to vector<2x8x8xf32>
    %9 = vector.shape_cast %6 : vector<2x8x8xf32> to vector<1x2x8x8xf32>
    tpu.vector_store %arg3[%c0_12, %c0_13, %c0_14, %c8], %9 {strides = array<i32>} : memref<1x2x8x16xf32, #tpu.memory_space<vmem>>, vector<1x2x8x8xf32>,
    return
  }
  func.func @transform_0(%arg0: i32, %arg1: i32) -> (i32, i32, i32, i32, i32) {
    %c0_i32 = arith.constant 0 : i32
    %c0_i32_0 = arith.constant 0 : i32
    %c0_i32_1 = arith.constant 0 : i32
    %c0_i32_2 = arith.constant 0 : i32
    return %arg0, %arg1, %c0_i32, %c0_i32_0, %c0_i32_1 : i32, i32, i32, i32, i32
  }
  func.func @transform_1(%arg0: i32, %arg1: i32) -> (i32, i32, i32, i32) {
    %c0_i32 = arith.constant 0 : i32
    %c0_i32_0 = arith.constant 0 : i32
    %c0_i32_1 = arith.constant 0 : i32
    return %arg0, %arg1, %c0_i32, %c0_i32_0 : i32, i32, i32, i32
  }
}

</mosaic_0001>

<llo_original>
// kernel: tpu_custom_call.1
$region0: #{tpu_custom_call.1}
  #allocation0 [shape = 'u32[]', space=smem, size = 0x4, offset = 0x4, fixed_abs, tag = 'smem constant byte address 0x4 - core index']
  #allocation1 [shape = 'u32[144,128]{1,0:T(1,128)}', space=vmem, size = 0x12000, scoped, tag = 'internal scratch']
  %s0 = inlined_call_operand.hbm [shape: f32[2,2,2,8,8], index: 0, kind: input, shape index: {}]
  %s1 = inlined_call_operand.hbm [shape: f32[2,2,8,16], index: 1, kind: output, shape index: {}]
  %s2 = sld [smem:[#allocation0]]
  $region41: #{tpu_custom_call.1} parent=0
    _
  %s4 = ssub.s32 1, %s2
  %s5 = scalar_select 0, %s4, %s2
  $region1: #{tpu_custom_call.1} parent=0
    #allocation2 [shape = 'u8[32768]{0}', space=vmem, size = 0x8000, scoped, tag = 'input window, operand 0']
    #allocation3 [shape = 's32[2]{0}', space=sflag, size = 0x8, scoped, tag = 'scoped memory for tpu_custom_call.1']
    #allocation4 [shape = 's32[2]{0}', space=sflag, size = 0x8, scoped, tag = 'scoped memory for tpu_custom_call.1']
    #allocation5 [shape = 'u8[16384]{0}', space=vmem, size = 0x4000, scoped, tag = 'output window, operand 0']
    %6 = vsyncpa [#allocation3], 0
    %s7 = scalar_lea.sflag [#allocation3], 1
    %8 = vsyncpa %s7, 0
    %9 = vsyncpa [#allocation4], 0
    %s10 = scalar_lea.sflag [#allocation4], 1
    %11 = vsyncpa %s10, 0
    loop: start=0, step=1, limit=4
    $region2: #{tpu_custom_call.1} parent=1 // loop_pre_header
      _
    $region3: #{tpu_custom_call.1} parent=1 // loop_header
      %s13 = sphi 0, %s17
      %p14 = scmp.ge.s32.totalorder %s13, 4
      %s20 = sphi 0, %s32
      %s21 = sphi 0, %s28
      %s22 = sphi 0, %s20
      %s23 = sphi 0, %s21
      %s24 = sphi 0, %s22
      %s25 = sphi 0, %s23
      %s37 = sphi 0, %s39
      %s40 = sphi 0, %s37
      %s41 = sphi 0, %s40
      %s57 = sphi 0, %s41
      %s65 = sphi 0, %s67
      %s68 = sphi 0, %s65
      %s69 = sphi 0, %s68
      %s85 = sphi 0, %s69
    $region4: #{tpu_custom_call.1} parent=1 // loop_header_branch
      %16 = sbr.rel (%p14) target = $region8
    $region5: #{tpu_custom_call.1} parent=1 // loop_body
      %s18 = ssub.s32 %s13, 1
      %s19 = ssub.s32 %s13, 2
      %s26 = sadd.s32 1, %s21
      %p27 = scmp.ge.s32.totalorder %s26, 1
      %s28 = scalar_select %p27, 0, %s26
      %s29 = sadd.s32 1, %s20
      %s30 = scalar_select %p27, %s29, %s20
      %p31 = scmp.ge.s32.totalorder %s30, 2
      %s32 = scalar_select %p31, 0, %s30
      %s33 = ssub.s32 %s20, %s32
      %s34 = ssub.s32 %s21, %s28
      %s35 = sor.u32 %s33, %s34
      %p36 = scmp.eq.s32.totalorder %s35, 0
      %s38 = sadd.s32 %s37, 1
      %s39 = scalar_select %p36, %s37, %s38
      %p42 = pneg %p36
      %p43 = scmp.eq.s32.totalorder %s13, 1
      %p44 = por %p42, %p43
      %p45 = scmp.ne.s32.totalorder %s37, %s40
      %p46 = scmp.eq.s32.totalorder %s13, 0
      %p47 = por %p45, %p46
      %p48 = scmp.ne.s32.totalorder %s37, %s40
      %p49 = scmp.eq.s32.totalorder %s18, 1
      %p50 = por %p48, %p49
      %p51 = scmp.ne.s32.totalorder %s40, %s41
      %p52 = scmp.eq.s32.totalorder %s18, 0
      %p53 = por %p51, %p52
      %p54 = scmp.ne.s32.totalorder %s40, %s41
      %p55 = scmp.eq.s32.totalorder %s19, 1
      %p56 = por %p54, %p55
      %p58 = scmp.ne.s32.totalorder %s41, %s57
      %p59 = scmp.eq.s32.totalorder %s19, 0
      %p60 = por %p58, %p59
      %s61 = ssub.s32 %s20, %s32
      %s62 = ssub.s32 %s21, %s28
      %s63 = sor.u32 %s61, %s62
      %p64 = scmp.eq.s32.totalorder %s63, 0
      %s66 = sadd.s32 %s65, 1
      %s67 = scalar_select %p64, %s65, %s66
      %p70 = pneg %p64
      %p71 = scmp.eq.s32.totalorder %s13, 1
      %p72 = por %p70, %p71
      %p73 = scmp.ne.s32.totalorder %s65, %s68
      %p74 = scmp.eq.s32.totalorder %s13, 0
      %p75 = por %p73, %p74
      %p76 = scmp.ne.s32.totalorder %s65, %s68
      %p77 = scmp.eq.s32.totalorder %s18, 1
      %p78 = por %p76, %p77
      %p79 = scmp.ne.s32.totalorder %s68, %s69
      %p80 = scmp.eq.s32.totalorder %s18, 0
      %p81 = por %p79, %p80
      %p82 = scmp.ne.s32.totalorder %s68, %s69
      %p83 = scmp.eq.s32.totalorder %s19, 1
      %p84 = por %p82, %p83
      %p86 = scmp.ne.s32.totalorder %s69, %s85
      %p87 = scmp.eq.s32.totalorder %s19, 0
      %p88 = por %p86, %p87
      %p89 = scmp.le.s32.totalorder 1, %s13
      %p90 = scmp.lt.s32.totalorder %s13, 3
      %p91 = pnand %p89, %p90
      %p92 = pneg %p91
      // Predicated region
      $region9: #{tpu_custom_call.1} parent=5 // pred_check
        _
      $region10: #{tpu_custom_call.1} parent=5 // pred_check_branch
        %94 = sbr.rel (%p91) target = $region12
      $region11: #{tpu_custom_call.1} parent=5 // pred_region
        %s95 = ssub.s32 %s13, 1
      $region12: #{tpu_custom_call.1} parent=5 // pred_fallthru
        _
      %p96 = scmp.lt.s32.totalorder %s13, 2
      // Predicated region
      $region13: #{tpu_custom_call.1} parent=5 // pred_check
        %p97 = pneg %p96
      $region14: #{tpu_custom_call.1} parent=5 // pred_check_branch
        %99 = sbr.rel (%p97) target = $region16
      $region15: #{tpu_custom_call.1} parent=5 // pred_region
        // Predicated region
        $region17: #{tpu_custom_call.1} parent=15 // pred_check
          %p100 = pneg %p47
        $region18: #{tpu_custom_call.1} parent=15 // pred_check_branch
          %102 = sbr.rel (%p100) target = $region20
        $region19: #{tpu_custom_call.1} parent=15 // pred_region
          %s103 = sand.u32 %s37, 1
          %s104 = scalar_lea.sflag [#allocation3], %s103
          %s105 = sand.u32 %s37, 1
          %s106 = smul.addr %s105, 32
          %s107 = scalar_lea.vmem [#allocation2], %s106
          %s108 = smul.u32 2, %s21
          %s110 = ssub.s32 512, 512
          %111 = vsyncadd %s104, %s110
          %s112 = smul.addr %s108, 2
          %s113 = smul.addr %s20, 4
          %s114 = sadd.s32 %s112, %s113
          %s115 = smul.addr %s114, 128
          %s116 = scalar_lea.hbm %s0, %s115
          %s117 = sshll.u32 %s107, 4
          %s118 = int_to_ptr.vmem [resolvable:$true] %s117
          %123 = dma.hbm_to_vmem [thread:$0]  %s116, 512, %s118, %s104, 128, 128, 8
        $region20: #{tpu_custom_call.1} parent=15 // pred_fallthru
          _
      $region16: #{tpu_custom_call.1} parent=5 // pred_fallthru
        _
      %p124 = scmp.le.s32.totalorder 1, %s13
      %p125 = scmp.lt.s32.totalorder %s13, 3
      %p126 = pnand %p124, %p125
      %p127 = pneg %p126
      // Predicated region
      $region21: #{tpu_custom_call.1} parent=5 // pred_check
        _
      $region22: #{tpu_custom_call.1} parent=5 // pred_check_branch
        %129 = sbr.rel (%p126) target = $region24
      $region23: #{tpu_custom_call.1} parent=5 // pred_region
        %s130 = ssub.s32 %s13, 1
        %s131 = sand.u32 %s40, 1
        %s132 = scalar_lea.sflag [#allocation3], %s131
        %s133 = sand.u32 %s40, 1
        %s134 = smul.addr %s133, 32
        %s135 = scalar_lea.vmem [#allocation2], %s134
        // Predicated region
        $region25: #{tpu_custom_call.1} parent=23 // pred_check
          %p136 = pneg %p53
        $region26: #{tpu_custom_call.1} parent=23 // pred_check_branch
          %138 = sbr.rel (%p136) target = $region28
        $region27: #{tpu_custom_call.1} parent=23 // pred_region
          %139 = dma.done %s132, 512
        $region28: #{tpu_custom_call.1} parent=23 // pred_fallthru
          _
        %s140 = sand.u32 %s40, 1
        %s141 = scalar_lea.sflag [#allocation3], %s140
        %s142 = sand.u32 %s40, 1
        %s143 = smul.addr %s142, 32
        %s144 = scalar_lea.vmem [#allocation2], %s143
        %p145 = pneg %p53
        %p146 = pneg %p50
        %p147 = pneg %p81
        %p148 = pneg %p78
        %s149 = sand.u32 %s68, 1
        %s150 = scalar_lea.sflag [#allocation4], %s149
        %s151 = sand.u32 %s68, 1
        %s152 = smul.addr %s151, 16
        %s153 = scalar_lea.vmem [#allocation5], %s152
        %s154 = smul.u32 2, %s23
        %s155 = smul.u32 2, %s23
        %v156 = vld [vmem:[%s135] sm:$0xff]
        %v157 = vld [vmem:[%s135 + $0x10] sm:$0xff]
        %vm158 = vcmask 64512
        %159 = vst.msk [vmem:[%s153] sm:$0xff] %vm158, %v156
        %160 = vst.msk [vmem:[%s153 + $0x8] sm:$0xff] %vm158, %v157
        %s161 = scalar_lea.vmem %s135, 8 [#allocation2]
        %v162 = vld [vmem:[%s161] sm:$0xff]
        %v163 = vld [vmem:[%s161 + $0x10] sm:$0xff]
        %166 = vrot.lane.b32.xlu0 %v162, 8
        %v167 = vpop.permute.xlu0 %166
        %168 = vrot.lane.b32.xlu0 %v163, 8
        %v169 = vpop.permute.xlu0 %168
        %vm172 = vcmask 130112
        %173 = vst.msk [vmem:[%s153] sm:$0xff] %vm172, %v167
        %174 = vst.msk [vmem:[%s153 + $0x8] sm:$0xff] %vm172, %v169
        %s175 = sand.u32 %s68, 1
        %s176 = scalar_lea.sflag [#allocation4], %s175
        %s177 = sand.u32 %s68, 1
        %s178 = smul.addr %s177, 16
        %s179 = scalar_lea.vmem [#allocation5], %s178
        // Predicated region
        $region29: #{tpu_custom_call.1} parent=23 // pred_check
          %p180 = pneg %p78
        $region30: #{tpu_custom_call.1} parent=23 // pred_check_branch
          %182 = sbr.rel (%p180) target = $region32
        $region31: #{tpu_custom_call.1} parent=23 // pred_region
          %s183 = smul.u32 2, %s23
          %s185 = ssub.s32 256, 256
          %186 = vsyncadd %s176, %s185
          %s187 = smul.addr %s22, 2
          %s188 = sadd.s32 %s183, %s187
          %s189 = smul.addr %s188, 128
          %s190 = scalar_lea.hbm %s1, %s189
          %s191 = sshll.u32 %s179, 4
          %s192 = int_to_ptr.vmem [resolvable:$true] %s191
          %197 = dma.vmem_to_hbm [thread:$0]  %s192, 256, %s190, %s176, 128, 128, 8
        $region32: #{tpu_custom_call.1} parent=23 // pred_fallthru
          _
      $region24: #{tpu_custom_call.1} parent=5 // pred_fallthru
        _
      %p198 = scmp.le.s32.totalorder 2, %s13
      // Predicated region
      $region33: #{tpu_custom_call.1} parent=5 // pred_check
        %p199 = pneg %p198
      $region34: #{tpu_custom_call.1} parent=5 // pred_check_branch
        %201 = sbr.rel (%p199) target = $region36
      $region35: #{tpu_custom_call.1} parent=5 // pred_region
        %s202 = ssub.s32 %s13, 2
        // Predicated region
        $region37: #{tpu_custom_call.1} parent=35 // pred_check
          %p203 = pneg %p84
        $region38: #{tpu_custom_call.1} parent=35 // pred_check_branch
          %205 = sbr.rel (%p203) target = $region40
        $region39: #{tpu_custom_call.1} parent=35 // pred_region
          %s206 = sand.u32 %s69, 1
          %s207 = scalar_lea.sflag [#allocation4], %s206
          %s208 = sand.u32 %s69, 1
          %s209 = smul.addr %s208, 16
          %s210 = scalar_lea.vmem [#allocation5], %s209
          %211 = dma.done %s207, 256
        $region40: #{tpu_custom_call.1} parent=35 // pred_fallthru
          _
      $region36: #{tpu_custom_call.1} parent=5 // pred_fallthru
        _
    $region6: #{tpu_custom_call.1} parent=1 // loop_footer
      %s17 = sadd.s32 1, %s13
    $region7: #{tpu_custom_call.1} parent=1 // loop_footer_branch
      %12 = sbr.rel target = $region3
    $region8: #{tpu_custom_call.1} parent=1 // loop_exit
      _
    %212 = vsyncpa [#allocation3], 1
    %s213 = scalar_lea.sflag [#allocation3], 1
    %214 = vsyncpa %s213, 1
    %215 = vsyncpa [#allocation4], 1
    %s216 = scalar_lea.sflag [#allocation4], 1
    %217 = vsyncpa %s216, 1

</llo_original>
